<compile_context>
chip_gen: v5e
topology: v5e:2x2
jax: 0.10.0
libtpu: 0.0.40
codegen_flags: <defaults>
</compile_context>

<pallas_src>
import functools
import math

import jax
import jax.numpy as jnp
from jax.experimental import pallas as pl
from jax.experimental.pallas import tpu as pltpu


# --------------------------------------------------------------------------- #
# Kernel
# --------------------------------------------------------------------------- #
def _ffn_kernel(x_ref, w1v_ref, b1v_ref, w1g_ref, b1g_ref, w2_ref, b2_ref,
                o_ref, *scratch, acc_in_output):
    k = pl.program_id(1)
    acc_ref = o_ref if acc_in_output else scratch[0]

    @pl.when(k == 0)
    def _():
        acc_ref[...] = jnp.zeros_like(acc_ref)

    x = x_ref[...]                                            # [tm, D] (bf16)

    # First projection, split into value / gate halves: [tm, D] @ [D, th].
    a = jnp.dot(x, w1v_ref[...], preferred_element_type=jnp.float32)
    a = a + b1v_ref[...]                                      # f32 [tm, th]
    g = jnp.dot(x, w1g_ref[...], preferred_element_type=jnp.float32)
    g = g + b1g_ref[...]                                      # f32 [tm, th]

    # GEGLU with exact GELU (erf form) -> matches torch F.gelu default.
    gelu_g = 0.5 * g * (1.0 + jax.lax.erf(g * (1.0 / math.sqrt(2.0))))
    z = (a * gelu_g).astype(w2_ref.dtype)                     # [tm, th] (bf16)

    # Second projection, accumulated over the hidden grid axis.
    acc_ref[...] += jnp.dot(z, w2_ref[...], preferred_element_type=jnp.float32)

    @pl.when(k == pl.num_programs(1) - 1)
    def _():
        if acc_in_output:
            o_ref[...] = o_ref[...] + b2_ref[...]             # f32 in place
        else:
            o_ref[...] = (acc_ref[...] + b2_ref[...]).astype(o_ref.dtype)


# --------------------------------------------------------------------------- #
# Init-time weight prep (call once, reuse across forward calls)
# --------------------------------------------------------------------------- #
def _round_up(x, m):
    return ((x + m - 1) // m) * m


def prepare_ffn_params(w1, b1, w2, b2, *, compute_dtype=jnp.bfloat16,
                       hidden_align=128):
    """Split GEGLU halves, cast weights to the MXU dtype, zero-pad the hidden
    axis to a multiple of `hidden_align`.  Padded hidden columns contribute
    exactly zero (bias is also zero-padded), so numerics are unchanged."""
    D, H2 = w1.shape
    H = H2 // 2
    Hp = _round_up(H, hidden_align)

    w1v, w1g = w1[:, :H], w1[:, H:]
    b1v, b1g = b1[:H], b1[H:]
    if Hp != H:
        pad = Hp - H
        w1v = jnp.pad(w1v, ((0, 0), (0, pad)))
        w1g = jnp.pad(w1g, ((0, 0), (0, pad)))
        b1v = jnp.pad(b1v, (0, pad))
        b1g = jnp.pad(b1g, (0, pad))
        w2 = jnp.pad(w2, ((0, pad), (0, 0)))

    return dict(
        w1v=w1v.astype(compute_dtype),
        w1g=w1g.astype(compute_dtype),
        b1v=b1v.reshape(1, Hp).astype(jnp.float32),
        b1g=b1g.reshape(1, Hp).astype(jnp.float32),
        w2=w2.astype(compute_dtype),
        b2=b2.reshape(1, -1).astype(jnp.float32),
    )


# --------------------------------------------------------------------------- #
# Generation-aware tile / VMEM policy
# --------------------------------------------------------------------------- #
def _vmem_capacity_bytes():
    try:
        return int(pltpu.get_tpu_info().vmem_capacity_bytes)
    except Exception:
        return 128 * 1024 * 1024  # v5e/v6e default


def _working_set_bytes(tm, th, D, compute_itemsize, out_itemsize, with_scratch):
    ws = (2 * tm * D * compute_itemsize        # x tile (double-buffered)
          + 2 * 2 * D * th * compute_itemsize  # w1 value + gate tiles
          + 2 * th * D * compute_itemsize      # w2 tile
          + 2 * 2 * 8 * th * 4                 # b1 value/gate tiles (f32, sublane-padded)
          + 2 * 8 * D * 4                      # b2 tile (f32)
          + 2 * tm * D * out_itemsize)         # output tile
    if with_scratch:
        ws += tm * D * 4                       # f32 accumulator scratch
    return ws


def _select_tiles(M, D, Hp, *, compute_itemsize, out_itemsize, with_scratch,
                  vmem_cap, block_m=None, block_h=None):
    budget = int(vmem_cap * 0.82)              # headroom for compiler scratch
    tm_cap = _round_up(M, 8)
    th_pref = block_h if block_h is not None else 512
    tm_targets = (block_m,) if block_m is not None else (1024, 768, 512, 384, 256, 128)

    # th candidates: multiples of 128 that divide Hp (Hp is a multiple of 128).
    th_opts = [t for t in range(min(Hp, max(th_pref, 128)), 0, -128) if Hp % t == 0]
    if not th_opts:
        th_opts = [Hp]
    tm_opts = sorted({max(min(t, tm_cap), 8) for t in tm_targets}, reverse=True)

    # Prefer large tm (weight re-streaming scales with M/tm); when trimming to
    # fit the budget, shrink th before shrinking tm (review guidance).
    for tm in tm_opts:
        for th in th_opts:
            ws = _working_set_bytes(tm, th, D, compute_itemsize, out_itemsize,
                                    with_scratch)
            if ws <= budget:
                return tm, th, ws
    tm, th = tm_opts[-1], th_opts[-1]
    return tm, th, _working_set_bytes(tm, th, D, compute_itemsize,
                                      out_itemsize, with_scratch)


# --------------------------------------------------------------------------- #
# pallas_call wrapper
# --------------------------------------------------------------------------- #
@functools.partial(
    jax.jit,
    static_argnames=("tm", "th", "vmem_limit", "acc_in_output", "compute_dtype"))
def _ffn_impl(x, w1v, b1v, w1g, b1g, w2, b2, *, tm, th, vmem_limit,
              acc_in_output, compute_dtype):
    B, S, D = x.shape
    M = B * S
    Hp = w2.shape[0]

    x2d = x.reshape(M, D).astype(compute_dtype)
    kernel = functools.partial(_ffn_kernel, acc_in_output=acc_in_output)
    scratch = [] if acc_in_output else [pltpu.VMEM((tm, D), jnp.float32)]

    out2d = pl.pallas_call(
        kernel,
        out_shape=jax.ShapeDtypeStruct((M, D), x.dtype),
        grid_spec=pltpu.PrefetchScalarGridSpec(
            num_scalar_prefetch=0,
            grid=(pl.cdiv(M, tm), Hp // th),
            in_specs=[
                pl.BlockSpec((tm, D), lambda i, k: (i, 0)),   # x
                pl.BlockSpec((D, th), lambda i, k: (0, k)),   # w1 value half
                pl.BlockSpec((1, th), lambda i, k: (0, k)),   # b1 value half
                pl.BlockSpec((D, th), lambda i, k: (0, k)),   # w1 gate half
                pl.BlockSpec((1, th), lambda i, k: (0, k)),   # b1 gate half
                pl.BlockSpec((th, D), lambda i, k: (k, 0)),   # w2
                pl.BlockSpec((1, D), lambda i, k: (0, 0)),    # b2
            ],
            out_specs=pl.BlockSpec((tm, D), lambda i, k: (i, 0)),
            scratch_shapes=scratch,
        ),
        compiler_params=pltpu.CompilerParams(
            dimension_semantics=("parallel", "arbitrary"),
            vmem_limit_bytes=vmem_limit,
        ),
    )(x2d, w1v, b1v, w1g, b1g, w2, b2)

    return out2d.reshape(B, S, D)


def feed_forward(x, params, *, compute_dtype=jnp.bfloat16,
                 block_m=None, block_h=None):
    """x: [B, S, D]; params: output of prepare_ffn_params (pre-split, padded)."""
    B, S, D = x.shape
    M = B * S
    Hp = params["w2"].shape[0]

    acc_in_output = (jnp.dtype(x.dtype) == jnp.dtype(jnp.float32))
    vmem_cap = _vmem_capacity_bytes()
    tm, th, ws = _select_tiles(
        M, D, Hp,
        compute_itemsize=jnp.dtype(compute_dtype).itemsize,
        out_itemsize=jnp.dtype(x.dtype).itemsize,
        with_scratch=not acc_in_output,
        vmem_cap=vmem_cap,
        block_m=block_m, block_h=block_h)
    vmem_limit = int(min(max(ws + (8 << 20), 32 << 20), vmem_cap))

    return _ffn_impl(x, params["w1v"], params["b1v"], params["w1g"],
                     params["b1g"], params["w2"], params["b2"],
                     tm=tm, th=th, vmem_limit=vmem_limit,
                     acc_in_output=acc_in_output,
                     compute_dtype=compute_dtype)


# --------------------------------------------------------------------------- #
# Pure-JAX reference mirroring the kernel's dtype flow (bf16 ops, f32 acc)
# --------------------------------------------------------------------------- #
def _reference(x, w1, b1, w2, b2, compute_dtype=jnp.bfloat16):
    H = w2.shape[0]
    xc = x.astype(compute_dtype)
    a = jnp.einsum("bsd,dh->bsh", xc, w1[:, :H].astype(compute_dtype),
                   preferred_element_type=jnp.float32) + b1[:H]
    g = jnp.einsum("bsd,dh->bsh", xc, w1[:, H:].astype(compute_dtype),
                   preferred_element_type=jnp.float32) + b1[H:]
    gelu_g = 0.5 * g * (1.0 + jax.lax.erf(g / jnp.sqrt(2.0)))
    z = (a * gelu_g).astype(compute_dtype)
    out = jnp.einsum("bsh,hd->bsd", z, w2.astype(compute_dtype),
                     preferred_element_type=jnp.float32) + b2
    return out.astype(x.dtype)


if __name__ == "__main__":
    # Module hyperparams: dim=32, mult=4 -> hidden=128, first proj -> 256.
    # (Demo shapes are small; they validate the path, not MXU throughput.)
    B, S, D = 2, 8, 32
    MULT = 4
    H = D * MULT

    key = jax.random.PRNGKey(0)
    kx, k1, kb1, k2, kb2 = jax.random.split(key, 5)

    x = jax.random.normal(kx, (B, S, D), dtype=jnp.float32)

    # Deterministic synthetic params (PyTorch-Linear-like uniform init).
    lim1 = 1.0 / math.sqrt(D)
    w1 = jax.random.uniform(k1, (D, 2 * H), minval=-lim1, maxval=lim1,
                            dtype=jnp.float32)
    b1 = jax.random.uniform(kb1, (2 * H,), minval=-lim1, maxval=lim1,
                            dtype=jnp.float32)
    lim2 = 1.0 / math.sqrt(H)
    w2 = jax.random.uniform(k2, (H, D), minval=-lim2, maxval=lim2,
                            dtype=jnp.float32)
    b2 = jax.random.uniform(kb2, (D,), minval=-lim2, maxval=lim2,
                            dtype=jnp.float32)

    # Init-time weight prep (done once, reused across calls).
    params = prepare_ffn_params(w1, b1, w2, b2)
    params = jax.tree_util.tree_map(jax.block_until_ready, params)

    out = feed_forward(x, params)
    out = jax.block_until_ready(out)

    ref = _reference(x, w1, b1, w2, b2)
    assert out.shape == (B, S, D)
    assert jnp.allclose(out, ref, atol=1e-2, rtol=1e-2), "mismatch vs reference"

    print("KERNEL_OK")
</pallas_src>

<mosaic_0001>
module attributes {stable_mosaic.version = 11 : i64} {
  func.func @_ffn_kernel(%arg0: i32, %arg1: i32, %arg2: memref<16x32xbf16, #tpu.memory_space<vmem>>, %arg3: memref<32x128xbf16, #tpu.memory_space<vmem>>, %arg4: memref<1x128xf32, #tpu.memory_space<vmem>>, %arg5: memref<32x128xbf16, #tpu.memory_space<vmem>>, %arg6: memref<1x128xf32, #tpu.memory_space<vmem>>, %arg7: memref<128x32xbf16, #tpu.memory_space<vmem>>, %arg8: memref<1x32xf32, #tpu.memory_space<vmem>>, %arg9: memref<16x32xf32, #tpu.memory_space<vmem>>) attributes {dimension_semantics = [#tpu.dimension_semantics<parallel>, #tpu.dimension_semantics<arbitrary>], iteration_bounds = array<i64: 1, 1>, scalar_prefetch = 0 : i64, scratch_operands = 0 : i64, tpu.core_type = #tpu.core_type<tc>, window_params = [{transform_indices = @transform_0, window_bounds = array<i64: 16, 32>}, {transform_indices = @transform_1, window_bounds = array<i64: 32, 128>}, {transform_indices = @transform_2, window_bounds = array<i64: 1, 128>}, {transform_indices = @transform_3, window_bounds = array<i64: 32, 128>}, {transform_indices = @transform_4, window_bounds = array<i64: 1, 128>}, {transform_indices = @transform_5, window_bounds = array<i64: 128, 32>}, {pipeline_mode = #tpu.pipeline_mode<synchronous>, transform_indices = @transform_6, window_bounds = array<i64: 1, 32>}, {transform_indices = @transform_7, window_bounds = array<i64: 16, 32>}]} {
    %c0_i32 = arith.constant 0 : i32
    %0 = arith.cmpi eq, %arg1, %c0_i32 : i32
    %1 = arith.extui %0 : i1 to i32
    %c0_i32_0 = arith.constant 0 : i32
    %2 = arith.cmpi ne, %1, %c0_i32_0 : i32
    scf.if %2 {
      %cst_23 = arith.constant 0.000000e+00 : f32
      %32 = vector.broadcast %cst_23 : f32 to vector<16x32xf32>
      %c0_24 = arith.constant 0 : index
      %c0_25 = arith.constant 0 : index
      %33 = vector.load %arg9[%c0_24, %c0_25] : memref<16x32xf32, #tpu.memory_space<vmem>>, vector<16x32xf32>
      tpu.vector_store %arg9[%c0_24, %c0_25], %32 {strides = array<i32>} : memref<16x32xf32, #tpu.memory_space<vmem>>, vector<16x32xf32>,
    } else {
    }
    %c0 = arith.constant 0 : index
    %c0_1 = arith.constant 0 : index
    %3 = vector.load %arg2[%c0, %c0_1] : memref<16x32xbf16, #tpu.memory_space<vmem>>, vector<16x32xbf16>
    %c0_2 = arith.constant 0 : index
    %c0_3 = arith.constant 0 : index
    %4 = vector.load %arg3[%c0_2, %c0_3] : memref<32x128xbf16, #tpu.memory_space<vmem>>, vector<32x128xbf16>
    %cst = arith.constant dense<0.000000e+00> : vector<16x128xf32>
    %5 = tpu.matmul %3, %4, %cst {dimension_numbers = #tpu.dot_dimension_numbers<[1], [0], [0], [1], [0, 0, 1, 1], [], []>} : vector<16x32xbf16>, vector<32x128xbf16>, vector<16x128xf32> -> vector<16x128xf32>
    %c0_4 = arith.constant 0 : index
    %c0_5 = arith.constant 0 : index
    %6 = vector.load %arg4[%c0_4, %c0_5] : memref<1x128xf32, #tpu.memory_space<vmem>>, vector<1x128xf32>
    %7 = vector.broadcast %6 : vector<1x128xf32> to vector<16x128xf32>
    %8 = arith.addf %5, %7 : vector<16x128xf32>
    %c0_6 = arith.constant 0 : index
    %c0_7 = arith.constant 0 : index
    %9 = vector.load %arg5[%c0_6, %c0_7] : memref<32x128xbf16, #tpu.memory_space<vmem>>, vector<32x128xbf16>
    %cst_8 = arith.constant dense<0.000000e+00> : vector<16x128xf32>
    %10 = tpu.matmul %3, %9, %cst_8 {dimension_numbers = #tpu.dot_dimension_numbers<[1], [0], [0], [1], [0, 0, 1, 1], [], []>} : vector<16x32xbf16>, vector<32x128xbf16>, vector<16x128xf32> -> vector<16x128xf32>
    %c0_9 = arith.constant 0 : index
    %c0_10 = arith.constant 0 : index
    %11 = vector.load %arg6[%c0_9, %c0_10] : memref<1x128xf32, #tpu.memory_space<vmem>>, vector<1x128xf32>
    %12 = vector.broadcast %11 : vector<1x128xf32> to vector<16x128xf32>
    %13 = arith.addf %10, %12 : vector<16x128xf32>
    %cst_11 = arith.constant 5.000000e-01 : f32
    %14 = vector.broadcast %cst_11 : f32 to vector<16x128xf32>
    %15 = arith.mulf %14, %13 : vector<16x128xf32>
    %cst_12 = arith.constant 0.707106769 : f32
    %16 = vector.broadcast %cst_12 : f32 to vector<16x128xf32>
    %17 = arith.mulf %13, %16 : vector<16x128xf32>
    %18 = math.erf %17 : vector<16x128xf32>
    %cst_13 = arith.constant 1.000000e+00 : f32
    %19 = vector.broadcast %cst_13 : f32 to vector<16x128xf32>
    %20 = arith.addf %19, %18 : vector<16x128xf32>
    %21 = arith.mulf %15, %20 : vector<16x128xf32>
    %22 = arith.mulf %8, %21 : vector<16x128xf32>
    %23 = arith.truncf %22 : vector<16x128xf32> to vector<16x128xbf16>
    %c0_14 = arith.constant 0 : index
    %c0_15 = arith.constant 0 : index
    %24 = vector.load %arg9[%c0_14, %c0_15] : memref<16x32xf32, #tpu.memory_space<vmem>>, vector<16x32xf32>
    %c0_16 = arith.constant 0 : index
    %c0_17 = arith.constant 0 : index
    %25 = vector.load %arg7[%c0_16, %c0_17] : memref<128x32xbf16, #tpu.memory_space<vmem>>, vector<128x32xbf16>
    %cst_18 = arith.constant dense<0.000000e+00> : vector<16x32xf32>
    %26 = tpu.matmul %23, %25, %cst_18 {dimension_numbers = #tpu.dot_dimension_numbers<[1], [0], [0], [1], [0, 0, 1, 1], [], []>} : vector<16x128xbf16>, vector<128x32xbf16>, vector<16x32xf32> -> vector<16x32xf32>
    %27 = arith.addf %24, %26 : vector<16x32xf32>
    %c0_19 = arith.constant 0 : index
    %c0_20 = arith.constant 0 : index
    %28 = vector.load %arg9[%c0_19, %c0_20] : memref<16x32xf32, #tpu.memory_space<vmem>>, vector<16x32xf32>
    tpu.vector_store %arg9[%c0_19, %c0_20], %27 {strides = array<i32>} : memref<16x32xf32, #tpu.memory_space<vmem>>, vector<16x32xf32>,
    %c0_i32_21 = arith.constant 0 : i32
    %29 = arith.cmpi eq, %arg1, %c0_i32_21 : i32
    %30 = arith.extui %29 : i1 to i32
    %c0_i32_22 = arith.constant 0 : i32
    %31 = arith.cmpi ne, %30, %c0_i32_22 : i32
    scf.if %31 {
      %c0_23 = arith.constant 0 : index
      %c0_24 = arith.constant 0 : index
      %32 = vector.load %arg9[%c0_23, %c0_24] : memref<16x32xf32, #tpu.memory_space<vmem>>, vector<16x32xf32>
      %c0_25 = arith.constant 0 : index
      %c0_26 = arith.constant 0 : index
      %33 = vector.load %arg8[%c0_25, %c0_26] : memref<1x32xf32, #tpu.memory_space<vmem>>, vector<1x32xf32>
      %34 = vector.broadcast %33 : vector<1x32xf32> to vector<16x32xf32>
      %35 = arith.addf %32, %34 : vector<16x32xf32>
      %c0_27 = arith.constant 0 : index
      %c0_28 = arith.constant 0 : index
      %36 = vector.load %arg9[%c0_27, %c0_28] : memref<16x32xf32, #tpu.memory_space<vmem>>, vector<16x32xf32>
      tpu.vector_store %arg9[%c0_27, %c0_28], %35 {strides = array<i32>} : memref<16x32xf32, #tpu.memory_space<vmem>>, vector<16x32xf32>,
    } else {
    }
    return
  }
  func.func @transform_0(%arg0: i32, %arg1: i32) -> (i32, i32) {
    %c0_i32 = arith.constant 0 : i32
    %c0_i32_0 = arith.constant 0 : i32
    return %arg0, %c0_i32 : i32, i32
  }
  func.func @transform_1(%arg0: i32, %arg1: i32) -> (i32, i32) {
    %c0_i32 = arith.constant 0 : i32
    %c0_i32_0 = arith.constant 0 : i32
    return %c0_i32, %arg1 : i32, i32
  }
  func.func @transform_2(%arg0: i32, %arg1: i32) -> (i32, i32) {
    %c0_i32 = arith.constant 0 : i32
    %c0_i32_0 = arith.constant 0 : i32
    return %c0_i32, %arg1 : i32, i32
  }
  func.func @transform_3(%arg0: i32, %arg1: i32) -> (i32, i32) {
    %c0_i32 = arith.constant 0 : i32
    %c0_i32_0 = arith.constant 0 : i32
    return %c0_i32, %arg1 : i32, i32
  }
  func.func @transform_4(%arg0: i32, %arg1: i32) -> (i32, i32) {
    %c0_i32 = arith.constant 0 : i32
    %c0_i32_0 = arith.constant 0 : i32
    return %c0_i32, %arg1 : i32, i32
  }
  func.func @transform_5(%arg0: i32, %arg1: i32) -> (i32, i32) {
    %c0_i32 = arith.constant 0 : i32
    %c0_i32_0 = arith.constant 0 : i32
    return %arg1, %c0_i32 : i32, i32
  }
  func.func @transform_6(%arg0: i32, %arg1: i32) -> (i32, i32) {
    %c0_i32 = arith.constant 0 : i32
    %c0_i32_0 = arith.constant 0 : i32
    %c0_i32_1 = arith.constant 0 : i32
    return %c0_i32, %c0_i32_0 : i32, i32
  }
  func.func @transform_7(%arg0: i32, %arg1: i32) -> (i32, i32) {
    %c0_i32 = arith.constant 0 : i32
    %c0_i32_0 = arith.constant 0 : i32
    return %arg0, %c0_i32 : i32, i32
  }
}

</mosaic_0001>

<llo_original>
// kernel: _ffn_impl.1
$region0: #{_ffn_impl.1}
  #allocation0 [shape = 'u32[]', space=smem, size = 0x4, offset = 0x4, fixed_abs, tag = 'smem constant byte address 0x4 - core index']
  #allocation1 [shape = 'u32[72,128]{1,0:T(1,128)}', space=vmem, size = 0x9000, scoped, tag = 'internal scratch']
  %s0 = inlined_call_operand.vmem [shape: bf16[16,32], index: 0, kind: input, shape index: {}]
  %s1 = inlined_call_operand.vmem [shape: bf16[32,128], index: 1, kind: input, shape index: {}]
  %s2 = inlined_call_operand.vmem [shape: f32[1,128], index: 2, kind: input, shape index: {}]
  %s3 = inlined_call_operand.vmem [shape: bf16[32,128], index: 3, kind: input, shape index: {}]
  %s4 = inlined_call_operand.vmem [shape: f32[1,128], index: 4, kind: input, shape index: {}]
  %s5 = inlined_call_operand.vmem [shape: bf16[128,32], index: 5, kind: input, shape index: {}]
  %s6 = inlined_call_operand.vmem [shape: f32[1,32], index: 6, kind: input, shape index: {}]
  %s7 = inlined_call_operand.hbm [shape: f32[16,32], index: 7, kind: output, shape index: {}]
  %s8 = sld [smem:[#allocation0]]
  $region46: #{_ffn_impl.1} parent=0
    _
  %s10 = ssub.s32 1, %s8
  %s11 = scalar_select 0, %s10, %s8
  $region1: #{_ffn_impl.1} parent=0
    #allocation2 [shape = 'u8[8192]{0}', space=vmem, size = 0x2000, scoped, tag = 'output window, operand 0, single buffered']
    #allocation3 [shape = 's32[1]{0}', space=sflag, size = 0x4, scoped, tag = 'scoped memory for _ffn_impl.1']
    %12 = vsyncpa [#allocation3], 0
    // Predicated region
    $region2: #{_ffn_impl.1} parent=1 // pred_check
      _
    $region3: #{_ffn_impl.1} parent=1 // pred_check_branch
      %14 = sbr.rel (0) target = $region5
    $region4: #{_ffn_impl.1} parent=1 // pred_region
      _
    $region5: #{_ffn_impl.1} parent=1 // pred_fallthru
      _
    // Predicated region
    $region6: #{_ffn_impl.1} parent=1 // pred_check
      _
    $region7: #{_ffn_impl.1} parent=1 // pred_check_branch
      %16 = sbr.rel (0) target = $region9
    $region8: #{_ffn_impl.1} parent=1 // pred_region
      _
    $region9: #{_ffn_impl.1} parent=1 // pred_fallthru
      _
    // Predicated region
    $region10: #{_ffn_impl.1} parent=1 // pred_check
      _
    $region11: #{_ffn_impl.1} parent=1 // pred_check_branch
      %18 = sbr.rel (0) target = $region13
    $region12: #{_ffn_impl.1} parent=1 // pred_region
      _
    $region13: #{_ffn_impl.1} parent=1 // pred_fallthru
      _
    // Predicated region
    $region14: #{_ffn_impl.1} parent=1 // pred_check
      _
    $region15: #{_ffn_impl.1} parent=1 // pred_check_branch
      %20 = sbr.rel (0) target = $region17
    $region16: #{_ffn_impl.1} parent=1 // pred_region
      _
    $region17: #{_ffn_impl.1} parent=1 // pred_fallthru
      _
    // Predicated region
    $region18: #{_ffn_impl.1} parent=1 // pred_check
      _
    $region19: #{_ffn_impl.1} parent=1 // pred_check_branch
      %22 = sbr.rel (0) target = $region21
    $region20: #{_ffn_impl.1} parent=1 // pred_region
      _
    $region21: #{_ffn_impl.1} parent=1 // pred_fallthru
      _
    // Predicated region
    $region22: #{_ffn_impl.1} parent=1 // pred_check
      _
    $region23: #{_ffn_impl.1} parent=1 // pred_check_branch
      %24 = sbr.rel (0) target = $region25
    $region24: #{_ffn_impl.1} parent=1 // pred_region
      _
    $region25: #{_ffn_impl.1} parent=1 // pred_fallthru
      _
    // Predicated region
    $region26: #{_ffn_impl.1} parent=1 // pred_check
      _
    $region27: #{_ffn_impl.1} parent=1 // pred_check_branch
      %26 = sbr.rel (0) target = $region29
    $region28: #{_ffn_impl.1} parent=1 // pred_region
      _
    $region29: #{_ffn_impl.1} parent=1 // pred_fallthru
      _
    %p28 = scmp.eq.s32.totalorder 0, 0
    // Predicated region
    $region30: #{_ffn_impl.1} parent=1 // pred_check
      %p29 = pneg %p28
    $region31: #{_ffn_impl.1} parent=1 // pred_check_branch
      %31 = sbr.rel (%p29) target = $region33
    $region32: #{_ffn_impl.1} parent=1 // pred_region
      %vm32 = vcmask 261120
      %33 = vst.msk [vmem:[#allocation2] sm:$0xff] %vm32, 0.0
      %34 = vst.msk [vmem:[#allocation2 + $0x8] sm:$0xff] %vm32, 0.0
    $region33: #{_ffn_impl.1} parent=1 // pred_fallthru
      _
    %v35 = vld [vmem:[%s0] sm:$0xf]
    %v36 = vld [vmem:[%s0 + $0x4] sm:$0xf]
    %v37 = vld [vmem:[%s1] sm:$0xf]
    %v38 = vld [vmem:[%s1 + $0x4] sm:$0xf]
    %v39 = vld [vmem:[%s1 + $0x8] sm:$0xf]
    %v40 = vld [vmem:[%s1 + $0xc] sm:$0xf]
    %v41 = vld [vmem:[%s2] sm:$0x1]
    %v43 = vperm.slane %v41, 0
    %v47 = vunpack.c.l.b16 %v35
    %v48 = vunpack.c.l.b16 %v36
    %v49 = vpack.c.b16 %v48, %v47
    %v54 = vunpack.c.l.b16 %v37
    %v55 = vunpack.c.l.b16 %v38
    %v56 = vunpack.c.l.b16 %v39
    %v57 = vunpack.c.l.b16 %v40
    %v58 = vpack.c.b16 %v55, %v54
    %v59 = vpack.c.b16 %v57, %v56
    %vm62 = vcmask 261120
    %v64 = vsel %vm62, %v49, 0
    %66 = vmatpush.bf16.msra.mxu0 0
    %67 = vmatpush.bf16.msra.mxu0 0
    %68 = vmatpush.bf16.msra.mxu0 0
    %69 = vmatpush.bf16.msra.mxu0 0
    %70 = vmatpush.bf16.msra.mxu0 0
    %71 = vmatpush.bf16.msra.mxu0 0
    %72 = vmatpush.bf16.msra.mxu0 %v59
    %73 = vmatpush.bf16.msra.mxu0 %v58
    %74 = vmatmul.bf16.gmra.mxu0 %v64
    %v75 = vpop.f32.mrf.mxu0
    %v76 = vadd.f32 %v43, %v75
    %v77 = vpop.f32.mrf.mxu0
    %v78 = vadd.f32 %v43, %v77
    %79 = vdwg.mxu0
    %v80 = vld [vmem:[%s3] sm:$0xf]
    %v81 = vld [vmem:[%s3 + $0x4] sm:$0xf]
    %v82 = vld [vmem:[%s3 + $0x8] sm:$0xf]
    %v83 = vld [vmem:[%s3 + $0xc] sm:$0xf]
    %v84 = vld [vmem:[%s4] sm:$0x1]
    %v86 = vperm.slane %v84, 0
    %v92 = vunpack.c.l.b16 %v80
    %v93 = vunpack.c.l.b16 %v81
    %v94 = vunpack.c.l.b16 %v82
    %v95 = vunpack.c.l.b16 %v83
    %v96 = vpack.c.b16 %v93, %v92
    %v97 = vpack.c.b16 %v95, %v94
    %100 = vmatpush.bf16.msra.mxu0 0
    %101 = vmatpush.bf16.msra.mxu0 0
    %102 = vmatpush.bf16.msra.mxu0 0
    %103 = vmatpush.bf16.msra.mxu0 0
    %104 = vmatpush.bf16.msra.mxu0 0
    %105 = vmatpush.bf16.msra.mxu0 0
    %106 = vmatpush.bf16.msra.mxu0 %v97
    %107 = vmatpush.bf16.msra.mxu0 %v96
    %108 = vmatmul.bf16.gmra.mxu0 %v64
    %v109 = vpop.f32.mrf.mxu0
    %v110 = vadd.f32 %v86, %v109
    %v111 = vpop.f32.mrf.mxu0
    %v112 = vadd.f32 %v86, %v111
    %113 = vdwg.mxu0
    %v114 = vmul.f32 %v110, 0.5
    %v115 = vmul.f32 %v112, 0.5
    %v116 = vmul.f32 %v110, 0.70710677
    %v117 = vmul.f32 %v112, 0.70710677
    %v118 = vmul.f32 %v116, %v116
    %v119 = vmin.f32 16.0, %v118
    %v120 = vmul.f32 %v119, 2.1237322e-06
    %v121 = vadd.f32 %v120, 0.00028619796
    %v122 = vmul.f32 %v119, %v121
    %v123 = vadd.f32 %v122, 0.0036580483
    %v124 = vmul.f32 %v119, %v123
    %v125 = vadd.f32 %v124, 0.05243302
    %v126 = vmul.f32 %v119, %v125
    %v127 = vadd.f32 %v126, 0.18741608
    %v128 = vmul.f32 %v119, %v127
    %v129 = vadd.f32 %v128, 1.1283791
    %v130 = vmul.f32 %v116, %v129
    %v131 = vmul.f32 %v119, 3.8918573e-05
    %v132 = vadd.f32 %v131, 0.001143296
    %v133 = vmul.f32 %v119, %v132
    %v134 = vadd.f32 %v133, 0.014752088
    %v135 = vmul.f32 %v119, %v134
    %v136 = vadd.f32 %v135, 0.112945676
    %v137 = vmul.f32 %v119, %v136
    %v138 = vadd.f32 %v137, 0.4994258
    %v139 = vmul.f32 %v119, %v138
    %v140 = vadd.f32 %v139, 1.0
    %v141 = vrcp.pop %v140
    %v142 = vmul.f32 %v140, %v141
    %v143 = vsub.f32 1.0, %v142
    %v144 = vmul.f32 %v141, %v143
    %v145 = vadd.f32 %v141, %v144
    %vm146 = vweird.f32 %v140
    %vm147 = vweird.f32 %v141
    %vm148 = vmor %vm146, %vm147
    %v149 = vsel %vm148, %v141, %v145
    %v150 = vand.u32 2147483647, %v140
    %vm151 = vcmp.eq.f32.partialorder %v150, 8.507059e+37
    %v152 = vand.u32 %v140, 2147483648
    %v153 = vor.u32 1.1754944e-38, %v152
    %v154 = vsel %vm151, %v153, %v149
    %v155 = vmul.f32 %v130, %v154
    %v156 = vmin.f32 %v155, 1.0
    %v157 = vmax.f32 %v156, -1.0
    %v158 = vmul.f32 %v117, %v117
    %v159 = vmin.f32 16.0, %v158
    %v160 = vmul.f32 %v159, 2.1237322e-06
    %v161 = vadd.f32 %v160, 0.00028619796
    %v162 = vmul.f32 %v159, %v161
    %v163 = vadd.f32 %v162, 0.0036580483
    %v164 = vmul.f32 %v159, %v163
    %v165 = vadd.f32 %v164, 0.05243302
    %v166 = vmul.f32 %v159, %v165
    %v167 = vadd.f32 %v166, 0.18741608
    %v168 = vmul.f32 %v159, %v167
    %v169 = vadd.f32 %v168, 1.1283791
    %v170 = vmul.f32 %v117, %v169
    %v171 = vmul.f32 %v159, 3.8918573e-05
    %v172 = vadd.f32 %v171, 0.001143296
    %v173 = vmul.f32 %v159, %v172
    %v174 = vadd.f32 %v173, 0.014752088
    %v175 = vmul.f32 %v159, %v174
    %v176 = vadd.f32 %v175, 0.112945676
    %v177 = vmul.f32 %v159, %v176
    %v178 = vadd.f32 %v177, 0.4994258
    %v179 = vmul.f32 %v159, %v178
    %v180 = vadd.f32 %v179, 1.0
    %v181 = vrcp.pop %v180
    %v182 = vmul.f32 %v180, %v181
    %v183 = vsub.f32 1.0, %v182
    %v184 = vmul.f32 %v181, %v183
    %v185 = vadd.f32 %v181, %v184
    %vm186 = vweird.f32 %v180
    %vm187 = vweird.f32 %v181
    %vm188 = vmor %vm186, %vm187
    %v189 = vsel %vm188, %v181, %v185
    %v190 = vand.u32 2147483647, %v180
    %vm191 = vcmp.eq.f32.partialorder %v190, 8.507059e+37
    %v192 = vand.u32 %v180, 2147483648
    %v193 = vor.u32 1.1754944e-38, %v192
    %v194 = vsel %vm191, %v193, %v189
    %v195 = vmul.f32 %v170, %v194
    %v196 = vmin.f32 %v195, 1.0
    %v197 = vmax.f32 %v196, -1.0
    %v198 = vadd.f32 %v157, 1.0
    %v199 = vadd.f32 %v197, 1.0
    %v200 = vmul.f32 %v114, %v198
    %v201 = vmul.f32 %v115, %v199
    %v202 = vmul.f32 %v76, %v200
    %v203 = vmul.f32 %v78, %v201
    %v204 = vpack.c.bf16 %v203, %v202
    %v205 = vld [vmem:[#allocation2] sm:$0xff]
    %v206 = vld [vmem:[#allocation2 + $0x8] sm:$0xff]
    %v207 = vld [vmem:[%s5] sm:$0xf]
    %v208 = vld [vmem:[%s5 + $0x4] sm:$0xf]
    %v209 = vld [vmem:[%s5 + $0x8] sm:$0xf]
    %v210 = vld [vmem:[%s5 + $0xc] sm:$0xf]
    %v211 = vld [vmem:[%s5 + $0x10] sm:$0xf]
    %v212 = vld [vmem:[%s5 + $0x14] sm:$0xf]
    %v213 = vld [vmem:[%s5 + $0x18] sm:$0xf]
    %v214 = vld [vmem:[%s5 + $0x1c] sm:$0xf]
    %v215 = vld [vmem:[%s5 + $0x20] sm:$0xf]
    %v216 = vld [vmem:[%s5 + $0x24] sm:$0xf]
    %v217 = vld [vmem:[%s5 + $0x28] sm:$0xf]
    %v218 = vld [vmem:[%s5 + $0x2c] sm:$0xf]
    %v219 = vld [vmem:[%s5 + $0x30] sm:$0xf]
    %v220 = vld [vmem:[%s5 + $0x34] sm:$0xf]
    %v221 = vld [vmem:[%s5 + $0x38] sm:$0xf]
    %v222 = vld [vmem:[%s5 + $0x3c] sm:$0xf]
    %v239 = vunpack.c.l.b16 %v207
    %v240 = vunpack.c.l.b16 %v208
    %v241 = vunpack.c.l.b16 %v209
    %v242 = vunpack.c.l.b16 %v210
    %v243 = vunpack.c.l.b16 %v211
    %v244 = vunpack.c.l.b16 %v212
    %v245 = vunpack.c.l.b16 %v213
    %v246 = vunpack.c.l.b16 %v214
    %v247 = vunpack.c.l.b16 %v215
    %v248 = vunpack.c.l.b16 %v216
    %v249 = vunpack.c.l.b16 %v217
    %v250 = vunpack.c.l.b16 %v218
    %v251 = vunpack.c.l.b16 %v219
    %v252 = vunpack.c.l.b16 %v220
    %v253 = vunpack.c.l.b16 %v221
    %v254 = vunpack.c.l.b16 %v222
    %v255 = vpack.c.b16 %v240, %v239
    %v256 = vpack.c.b16 %v242, %v241
    %v257 = vpack.c.b16 %v244, %v243
    %v258 = vpack.c.b16 %v246, %v245
    %v259 = vpack.c.b16 %v248, %v247
    %v260 = vpack.c.b16 %v250, %v249
    %v261 = vpack.c.b16 %v252, %v251
    %v262 = vpack.c.b16 %v254, %v253
    %271 = vmatpush.bf16.msra.mxu0 %v262
    %272 = vmatpush.bf16.msra.mxu0 %v261
    %273 = vmatpush.bf16.msra.mxu0 %v260
    %274 = vmatpush.bf16.msra.mxu0 %v259
    %275 = vmatpush.bf16.msra.mxu0 %v258
    %276 = vmatpush.bf16.msra.mxu0 %v257
    %277 = vmatpush.bf16.msra.mxu0 %v256
    %278 = vmatpush.bf16.msra.mxu0 %v255
    %279 = vmatmul.bf16.gmra.mxu0 %v204
    %v280 = vpop.f32.mrf.mxu0
    %v281 = vadd.f32 0.0, %v280
    %v282 = vpop.f32.mrf.mxu0
    %v283 = vadd.f32 0.0, %v282
    %284 = vdwg.mxu0
    %v285 = vadd.f32 %v205, %v281
    %v286 = vadd.f32 %v206, %v283
    %287 = vst.msk [vmem:[#allocation2] sm:$0xff] %vm62, %v285
    %288 = vst.msk [vmem:[#allocation2 + $0x8] sm:$0xff] %vm62, %v286
    // Predicated region
    $region34: #{_ffn_impl.1} parent=1 // pred_check
      %p289 = pneg %p28
    $region35: #{_ffn_impl.1} parent=1 // pred_check_branch
      %291 = sbr.rel (%p289) target = $region37
    $region36: #{_ffn_impl.1} parent=1 // pred_region
      %v292 = vld [vmem:[#allocation2] sm:$0xff]
      %v293 = vld [vmem:[#allocation2 + $0x8] sm:$0xff]
      %v294 = vld [vmem:[%s6] sm:$0x1]
      %v296 = vperm.slane %v294, 0
      %v298 = vadd.f32 %v292, %v296
      %v299 = vadd.f32 %v293, %v296
      %300 = vst.msk [vmem:[#allocation2] sm:$0xff] %vm62, %v298
      %301 = vst.msk [vmem:[#allocation2 + $0x8] sm:$0xff] %vm62, %v299
    $region37: #{_ffn_impl.1} parent=1 // pred_fallthru
      _
    // Predicated region
    $region38: #{_ffn_impl.1} parent=1 // pred_check
      _
    $region39: #{_ffn_impl.1} parent=1 // pred_check_branch
      %303 = sbr.rel (0) target = $region41
    $region40: #{_ffn_impl.1} parent=1 // pred_region
      %305 = vsyncadd [#allocation3], 0
      %s306 = sshll.u32 [#allocation2], 4
      %s307 = int_to_ptr.vmem [resolvable:$true] %s306
      %s308 = sshll.u32 %s7, 4
      %s309 = int_to_ptr.hbm [resolvable:$true] %s308
      %314 = dma.vmem_to_hbm [thread:$0]  %s307, 256, %s309, [#allocation3], 128, 128, 8
    $region41: #{_ffn_impl.1} parent=1 // pred_fallthru
      _
    // Predicated region
    $region42: #{_ffn_impl.1} parent=1 // pred_check
      _
    $region43: #{_ffn_impl.1} parent=1 // pred_check_branch
      %316 = sbr.rel (0) target = $region45
    $region44: #{_ffn_impl.1} parent=1 // pred_region
      %318 = dma.done [#allocation3], 256
    $region45: #{_ffn_impl.1} parent=1 // pred_fallthru
      _
    %319 = vsyncpa [#allocation3], 1

</llo_original>
